<compile_context>
chip_gen: v6e
topology: v6e:2x2x1
jax: 0.10.0
libtpu: 0.0.40
codegen_flags: <defaults>
</compile_context>

<pallas_src>
import math
import functools

import numpy as np
import jax
import jax.numpy as jnp
from jax import lax
from jax.experimental import pallas as pl
from jax.experimental.pallas import tpu as pltpu


# --------------------------------------------------------------------------
# Small utilities.
# --------------------------------------------------------------------------
def _round_up(x, m):
    return (x + m - 1) // m * m


def _padded_bytes(shape, dtype):
    """VMEM bytes of one block, accounting for (sublane, lane) tile padding."""
    itemsize = jnp.dtype(dtype).itemsize
    s = [int(d) for d in shape] if shape else [1]
    s[-1] = _round_up(s[-1], 128)
    if len(s) >= 2:
        s[-2] = _round_up(s[-2], max(8, 32 // itemsize))
    n = 1
    for d in s:
        n *= d
    return n * itemsize


def _vmem_limit(entries):
    """entries: iterable of (block_shape, dtype, n_buffers). Padding-aware."""
    total = sum(bufs * _padded_bytes(shape, dtype) for shape, dtype, bufs in entries)
    total = int(total * 1.4) + (2 << 20)          # compiler-internal headroom
    try:
        cap = int(pltpu.get_tpu_info().vmem_capacity_bytes) * 3 // 4
    except Exception:
        cap = 48 * 1024 * 1024                    # assume the smallest (v7x) VMEM
    return max(min(total, cap), 32 * 1024 * 1024)


def _bf16_exp_ok():
    # bf16 EUP exists on v6e / v7x; v5e and older only do f32 transcendentals.
    try:
        kind = jax.devices()[0].device_kind.lower()
    except Exception:
        return False
    return any(tag in kind for tag in ("v6", "v7", "7x"))


def _choose_tile(T, B):
    """Sequence tile: >=2 grid cells when possible (v7x dual TC), (8,128)-safe."""
    for cand in (256, 128):
        if T % cand == 0 and T // cand >= 2:
            return cand
    if B == 1 and T % 16 == 0 and T >= 32:
        return T // 2
    return T


# --------------------------------------------------------------------------
# Kernel 1: per-channel scale (GroupNorm folded) + fused qkv 1x1 conv.
# --------------------------------------------------------------------------
def _norm_qkv_kernel(x_ref, scale_ref, bias_ref, w_ref, q_ref, k_ref, v_ref):
    # x_ref:     (1, TT, C)  f32   input tile, (T, C)-major
    # scale_ref: (1, 1, C)   f32   per-batch  gamma * rsqrt(var)
    # bias_ref:  (1, 3, 1, C) f32  per-batch  (beta-shift @ W_qkv + b_qkv), q/k scaled
    # w_ref:     (3, C, C)   bf16  qkv weights, attention scale folded into q/k
    xn = (x_ref[0] * scale_ref[0]).astype(jnp.bfloat16)            # (TT, C)
    for j, out in enumerate((q_ref, k_ref, v_ref)):
        y = jnp.dot(xn, w_ref[j], preferred_element_type=jnp.float32) + bias_ref[0, j]
        out[0] = y.astype(out.dtype)


# --------------------------------------------------------------------------
# Kernel 2: multi-head attention + proj 1x1 conv + residual for one
# (batch, query-tile) grid cell.
# --------------------------------------------------------------------------
def _attention_proj_kernel(q_ref, k_ref, v_ref, x_ref, wproj_ref, bproj_ref,
                           o_ref, *, num_heads, head_dim, exp_dtype):
    # q_ref:       (1, TQ, C) bf16   (scale pre-folded, head-major channels)
    # k_ref/v_ref: (1, T,  C) bf16   (whole sequence, resident across q tiles)
    # x_ref:       (1, TQ, C) f32    residual tile
    # wproj_ref:   (C, C) bf16 (in, out), bproj_ref: (1, C) f32
    q_all = q_ref[0]
    k_all = k_ref[0]
    v_all = v_ref[0]

    heads = []
    for h in range(num_heads):                                      # static unroll
        lo = h * head_dim
        q = q_all[:, lo:lo + head_dim]                              # (TQ, ch)
        k = k_all[:, lo:lo + head_dim]                              # (T,  ch)
        v = v_all[:, lo:lo + head_dim]                              # (T,  ch)
        s = lax.dot_general(q, k, (((1,), (1,)), ((), ())),
                            preferred_element_type=jnp.float32)     # (TQ, T) f32
        s = s - jnp.max(s, axis=-1, keepdims=True)
        p = jnp.exp(s.astype(exp_dtype))                            # bf16 exp on v6e/v7x
        denom = jnp.sum(p.astype(jnp.float32), axis=-1, keepdims=True)   # (TQ, 1)
        a = jnp.dot(p.astype(jnp.bfloat16), v,
                    preferred_element_type=jnp.float32)             # (TQ, ch) f32
        # Softmax denominator applied AFTER p@v (scales the small matrix only).
        a = a * pl.reciprocal(denom, approx=True)
        heads.append(a.astype(jnp.bfloat16))

    att = jnp.concatenate(heads, axis=-1) if num_heads > 1 else heads[0]   # (TQ, C)
    # One full-depth proj matmul for all heads, then bias + residual -> output.
    proj = jnp.dot(att, wproj_ref[...], preferred_element_type=jnp.float32)
    o_ref[0] = (x_ref[0] + bproj_ref[...] + proj).astype(o_ref.dtype)


# --------------------------------------------------------------------------
# Wrapper.
# --------------------------------------------------------------------------
def attention_block(x, params, *, num_heads, num_groups=32, eps=1e-5,
                    q_tile=None, use_bf16_exp=None):
    """x: (B, C, H, W) float32 (NCHW, same as PyTorch AttentionBlock)."""
    B, C, H, W = x.shape
    T = H * W
    assert C % num_groups == 0 and C % num_heads == 0
    ch = C // num_heads
    cg = C // num_groups
    if use_bf16_exp is None:
        use_bf16_exp = _bf16_exp_ok()
    exp_dtype = jnp.bfloat16 if use_bf16_exp else jnp.float32

    # ---- layout plumbing: (B, C, T) -> (B, T, C), channels lane-dense -------
    x_tc = jnp.transpose(x.reshape(B, C, T).astype(jnp.float32), (0, 2, 1))

    # ---- GroupNorm statistics in the wrapper (two-pass, exact) --------------
    xg = x.reshape(B, num_groups, cg * T).astype(jnp.float32)
    gmean = jnp.mean(xg, axis=-1)                                   # (B, G)
    gvar = jnp.mean(jnp.square(xg - gmean[..., None]), axis=-1)     # (B, G)
    rstd = lax.rsqrt(gvar + eps)
    gn_w = params["gn_w"].astype(jnp.float32)
    gn_b = params["gn_b"].astype(jnp.float32)
    scale_c = gn_w[None, :] * jnp.repeat(rstd, cg, axis=1)          # (B, C)
    shift_c = gn_b[None, :] - jnp.repeat(gmean * rstd, cg, axis=1) * gn_w[None, :]

    # ---- qkv conv weights: legacy rows [h,(q|k|v),ch] -> columns [q|k|v][h,ch],
    # attention scale 1/ch**0.25 folded into q/k, transposed to (C_in, 3*C_out).
    n = np.arange(3 * C)
    j_np, rem = n // C, n % C
    h_idx, cp = rem // ch, rem % ch
    perm = h_idx * 3 * ch + j_np * ch + cp                          # new col n <- old row perm[n]
    attn_scale = 1.0 / math.sqrt(math.sqrt(ch))
    col_scale = jnp.asarray(np.where(j_np < 2, attn_scale, 1.0).astype(np.float32))

    w_qkv = params["w_qkv"].astype(jnp.float32)                     # (3C, C) (out, in)
    b_qkv = params["b_qkv"].astype(jnp.float32)                     # (3C,)
    w_qkv_t = (w_qkv[perm, :] * col_scale[:, None]).T               # (C, 3C) f32
    b_qkv_p = b_qkv[perm] * col_scale                                # (3C,)

    # Per-batch qkv bias: GroupNorm shift folded through the conv.
    bias_full = shift_c @ w_qkv_t + b_qkv_p[None, :]                 # (B, 3C)
    bias_qkv = bias_full.reshape(B, 3, 1, C)
    w3 = jnp.transpose(w_qkv_t.reshape(C, 3, C), (1, 0, 2)).astype(jnp.bfloat16)  # (3, C, C)

    w_proj = params["w_proj"].astype(jnp.float32).T.astype(jnp.bfloat16)  # (C_in, C_out)
    b_proj = params["b_proj"].reshape(1, C).astype(jnp.float32)
    scale_in = scale_c.reshape(B, 1, C)

    # ---- kernel 1: normalize + fused qkv conv over grid (B, T tiles) --------
    TT = _choose_tile(T, B)
    NT = T // TT
    qkv_struct = jax.ShapeDtypeStruct((B, T, C), jnp.bfloat16)
    q, k, v = pl.pallas_call(
        _norm_qkv_kernel,
        out_shape=(qkv_struct, qkv_struct, qkv_struct),
        grid=(B, NT),
        in_specs=[
            pl.BlockSpec((1, TT, C), lambda b, t: (b, t, 0)),        # x tile
            pl.BlockSpec((1, 1, C), lambda b, t: (b, 0, 0)),         # per-batch scale
            pl.BlockSpec((1, 3, 1, C), lambda b, t: (b, 0, 0, 0)),   # per-batch qkv bias
            pl.BlockSpec((3, C, C), lambda b, t: (0, 0, 0)),         # qkv weights
        ],
        out_specs=(
            pl.BlockSpec((1, TT, C), lambda b, t: (b, t, 0)),
            pl.BlockSpec((1, TT, C), lambda b, t: (b, t, 0)),
            pl.BlockSpec((1, TT, C), lambda b, t: (b, t, 0)),
        ),
        compiler_params=pltpu.CompilerParams(
            dimension_semantics=("parallel", "parallel"),
            vmem_limit_bytes=_vmem_limit([
                ((TT, C), jnp.float32, 2),          # x tile (double buffered)
                ((TT, C), jnp.bfloat16, 6),         # q/k/v output tiles
                ((3, C, C), jnp.bfloat16, 2),       # fused weight
                ((TT, C), jnp.float32, 3),          # f32 intermediates
            ])),
    )(x_tc, scale_in, bias_qkv, w3)

    # ---- kernel 2: attention + proj + residual over grid (B, query tiles) ---
    TQ = q_tile if q_tile is not None else _choose_tile(T, B)
    assert T % TQ == 0 and (TQ % 8 == 0 or TQ == T)
    NQ = T // TQ

    out_tc = pl.pallas_call(
        functools.partial(_attention_proj_kernel, num_heads=num_heads,
                          head_dim=ch, exp_dtype=exp_dtype),
        out_shape=jax.ShapeDtypeStruct((B, T, C), x.dtype),
        grid=(B, NQ),
        in_specs=[
            pl.BlockSpec((1, TQ, C), lambda b, t: (b, t, 0)),        # q tile
            pl.BlockSpec((1, T, C), lambda b, t: (b, 0, 0)),         # K (whole)
            pl.BlockSpec((1, T, C), lambda b, t: (b, 0, 0)),         # V (whole)
            pl.BlockSpec((1, TQ, C), lambda b, t: (b, t, 0)),        # residual tile
            pl.BlockSpec((C, C), lambda b, t: (0, 0)),               # W_proj (in, out)
            pl.BlockSpec((1, C), lambda b, t: (0, 0)),               # b_proj
        ],
        out_specs=pl.BlockSpec((1, TQ, C), lambda b, t: (b, t, 0)),
        compiler_params=pltpu.CompilerParams(
            dimension_semantics=("parallel", "parallel"),
            vmem_limit_bytes=_vmem_limit([
                ((TQ, C), jnp.bfloat16, 2),         # q tiles
                ((T, C), jnp.bfloat16, 4),          # K and V (double buffered)
                ((TQ, C), jnp.float32, 2),          # residual tiles
                ((TQ, C), jnp.float32, 2),          # output tiles
                ((C, C), jnp.bfloat16, 2),          # proj weight
                ((TQ, T), jnp.float32, 3),          # score / softmax intermediates
                ((TQ, C), jnp.float32, 2),          # per-head results / att slab
            ])),
    )(q, k, v, x_tc, w_proj, b_proj)

    return jnp.transpose(out_tc, (0, 2, 1)).reshape(B, C, H, W)


# --------------------------------------------------------------------------
# Pure-JAX reference reproducing the PyTorch forward exactly (f32).
# --------------------------------------------------------------------------
def attention_block_ref(x, params, *, num_heads, num_groups=32, eps=1e-5):
    B, C, H, W = x.shape
    T = H * W
    xr = x.reshape(B, C, T)
    xg = xr.reshape(B, num_groups, -1)
    mean = xg.mean(-1, keepdims=True)
    var = ((xg - mean) ** 2).mean(-1, keepdims=True)
    xn = ((xg - mean) / jnp.sqrt(var + eps)).reshape(B, C, T)
    xn = xn * params["gn_w"][None, :, None] + params["gn_b"][None, :, None]
    qkv = jnp.einsum("oc,bct->bot", params["w_qkv"], xn) + params["b_qkv"][None, :, None]
    ch = C // num_heads
    qkv = qkv.reshape(B * num_heads, 3 * ch, T)
    q, k, v = qkv[:, :ch], qkv[:, ch:2 * ch], qkv[:, 2 * ch:]
    scale = 1.0 / math.sqrt(math.sqrt(ch))
    w = jnp.einsum("bct,bcs->bts", q * scale, k * scale)
    w = jax.nn.softmax(w, axis=-1)
    a = jnp.einsum("bts,bcs->bct", w, v).reshape(B, C, T)
    hp = jnp.einsum("oc,bct->bot", params["w_proj"], a) + params["b_proj"][None, :, None]
    return (xr + hp).reshape(B, C, H, W)


if __name__ == "__main__":
    def make_params(key, C):
        k1, k2, k3, k4, k5, k6 = jax.random.split(key, 6)
        return {
            # GroupNorm affine (slightly perturbed from the PyTorch default so
            # the scale/shift folding paths are actually exercised).
            "gn_w": 1.0 + 0.1 * jax.random.normal(k5, (C,), dtype=jnp.float32),
            "gn_b": 0.1 * jax.random.normal(k6, (C,), dtype=jnp.float32),
            # qkv / proj 1x1 Conv1d weights.  The real module zero-inits
            # proj_out; small random values are used so the attention path
            # actually contributes to the checked output.
            "w_qkv": 0.05 * jax.random.normal(k1, (3 * C, C), dtype=jnp.float32),
            "b_qkv": 0.05 * jax.random.normal(k2, (3 * C,), dtype=jnp.float32),
            "w_proj": 0.05 * jax.random.normal(k3, (C, C), dtype=jnp.float32),
            "b_proj": 0.05 * jax.random.normal(k4, (C,), dtype=jnp.float32),
        }

    key = jax.random.PRNGKey(0)
    configs = [
        # (B, C, H, W, num_heads): T=256 exercises the multi-tile T/query grid
        # axes; B=1, T=64 exercises the small-T path (tile = T//2).
        (2, 64, 16, 16, 4),
        (1, 64, 8, 8, 2),
    ]
    for (B, C, Hs, Ws, nh) in configs:
        key, kx, kp = jax.random.split(key, 3)
        x = jax.random.normal(kx, (B, C, Hs, Ws), dtype=jnp.float32)
        params = make_params(kp, C)

        out = attention_block(x, params, num_heads=nh, num_groups=32)
        out = jax.block_until_ready(out)
        ref = attention_block_ref(x, params, num_heads=nh, num_groups=32)

        assert out.shape == x.shape
        err = float(jnp.max(jnp.abs(out - ref)))
        # bf16 MXU operands (+ bf16 exp on v6e/v7x) + approx reciprocal.
        assert err < 3e-2, f"max abs err = {err} for config {(B, C, Hs, Ws, nh)}"

    print("KERNEL_OK")
</pallas_src>

<mosaic_0001>
module attributes {stable_mosaic.version = 11 : i64} {
  func.func @_norm_qkv_kernel(%arg0: i32, %arg1: i32, %arg2: memref<1x128x64xf32, #tpu.memory_space<vmem>>, %arg3: memref<1x1x64xf32, #tpu.memory_space<vmem>>, %arg4: memref<1x3x1x64xf32, #tpu.memory_space<vmem>>, %arg5: memref<3x64x64xbf16, #tpu.memory_space<vmem>>, %arg6: memref<1x128x64xbf16, #tpu.memory_space<vmem>>, %arg7: memref<1x128x64xbf16, #tpu.memory_space<vmem>>, %arg8: memref<1x128x64xbf16, #tpu.memory_space<vmem>>) attributes {dimension_semantics = [#tpu.dimension_semantics<parallel>, #tpu.dimension_semantics<parallel>], iteration_bounds = array<i64: 2, 2>, scalar_prefetch = 0 : i64, scratch_operands = 0 : i64, tpu.core_type = #tpu.core_type<tc>, window_params = [{transform_indices = @transform_0, window_bounds = array<i64: 1, 128, 64>}, {transform_indices = @transform_1, window_bounds = array<i64: 1, 1, 64>}, {transform_indices = @transform_2, window_bounds = array<i64: 1, 3, 1, 64>}, {pipeline_mode = #tpu.pipeline_mode<synchronous>, transform_indices = @transform_3, window_bounds = array<i64: 3, 64, 64>}, {transform_indices = @transform_4, window_bounds = array<i64: 1, 128, 64>}, {transform_indices = @transform_5, window_bounds = array<i64: 1, 128, 64>}, {transform_indices = @transform_6, window_bounds = array<i64: 1, 128, 64>}]} {
    %c0 = arith.constant 0 : index
    %c0_0 = arith.constant 0 : index
    %c0_1 = arith.constant 0 : index
    %0 = vector.load %arg2[%c0, %c0_0, %c0_1] : memref<1x128x64xf32, #tpu.memory_space<vmem>>, vector<1x128x64xf32>
    %1 = vector.shape_cast %0 : vector<1x128x64xf32> to vector<128x64xf32>
    %c0_2 = arith.constant 0 : index
    %c0_3 = arith.constant 0 : index
    %c0_4 = arith.constant 0 : index
    %2 = vector.load %arg3[%c0_2, %c0_3, %c0_4] : memref<1x1x64xf32, #tpu.memory_space<vmem>>, vector<1x1x64xf32>
    %3 = vector.shape_cast %2 : vector<1x1x64xf32> to vector<1x64xf32>
    %4 = vector.broadcast %3 : vector<1x64xf32> to vector<128x64xf32>
    %5 = arith.mulf %1, %4 : vector<128x64xf32>
    %6 = arith.truncf %5 : vector<128x64xf32> to vector<128x64xbf16>
    %c0_5 = arith.constant 0 : index
    %c0_6 = arith.constant 0 : index
    %c0_7 = arith.constant 0 : index
    %7 = vector.load %arg5[%c0_5, %c0_6, %c0_7] : memref<3x64x64xbf16, #tpu.memory_space<vmem>>, vector<1x64x64xbf16>
    %8 = vector.shape_cast %7 : vector<1x64x64xbf16> to vector<64x64xbf16>
    %cst = arith.constant dense<0.000000e+00> : vector<128x64xf32>
    %9 = tpu.matmul %6, %8, %cst {dimension_numbers = #tpu.dot_dimension_numbers<[1], [0], [0], [1], [0, 0, 1, 1], [], []>} : vector<128x64xbf16>, vector<64x64xbf16>, vector<128x64xf32> -> vector<128x64xf32>
    %c0_8 = arith.constant 0 : index
    %c0_9 = arith.constant 0 : index
    %c0_10 = arith.constant 0 : index
    %c0_11 = arith.constant 0 : index
    %10 = vector.load %arg4[%c0_8, %c0_9, %c0_10, %c0_11] : memref<1x3x1x64xf32, #tpu.memory_space<vmem>>, vector<1x1x1x64xf32>
    %11 = vector.shape_cast %10 : vector<1x1x1x64xf32> to vector<1x64xf32>
    %12 = vector.broadcast %11 : vector<1x64xf32> to vector<128x64xf32>
    %13 = arith.addf %9, %12 : vector<128x64xf32>
    %14 = arith.truncf %13 : vector<128x64xf32> to vector<128x64xbf16>
    %c0_12 = arith.constant 0 : index
    %c0_13 = arith.constant 0 : index
    %c0_14 = arith.constant 0 : index
    %15 = vector.load %arg6[%c0_12, %c0_13, %c0_14] : memref<1x128x64xbf16, #tpu.memory_space<vmem>>, vector<1x128x64xbf16>
    %16 = vector.shape_cast %15 : vector<1x128x64xbf16> to vector<128x64xbf16>
    %17 = vector.shape_cast %14 : vector<128x64xbf16> to vector<1x128x64xbf16>
    tpu.vector_store %arg6[%c0_12, %c0_13, %c0_14], %17 {strides = array<i32>} : memref<1x128x64xbf16, #tpu.memory_space<vmem>>, vector<1x128x64xbf16>,
    %c1 = arith.constant 1 : index
    %c0_15 = arith.constant 0 : index
    %c0_16 = arith.constant 0 : index
    %18 = vector.load %arg5[%c1, %c0_15, %c0_16] : memref<3x64x64xbf16, #tpu.memory_space<vmem>>, vector<1x64x64xbf16>
    %19 = vector.shape_cast %18 : vector<1x64x64xbf16> to vector<64x64xbf16>
    %cst_17 = arith.constant dense<0.000000e+00> : vector<128x64xf32>
    %20 = tpu.matmul %6, %19, %cst_17 {dimension_numbers = #tpu.dot_dimension_numbers<[1], [0], [0], [1], [0, 0, 1, 1], [], []>} : vector<128x64xbf16>, vector<64x64xbf16>, vector<128x64xf32> -> vector<128x64xf32>
    %c0_18 = arith.constant 0 : index
    %c1_19 = arith.constant 1 : index
    %c0_20 = arith.constant 0 : index
    %c0_21 = arith.constant 0 : index
    %21 = vector.load %arg4[%c0_18, %c1_19, %c0_20, %c0_21] : memref<1x3x1x64xf32, #tpu.memory_space<vmem>>, vector<1x1x1x64xf32>
    %22 = vector.shape_cast %21 : vector<1x1x1x64xf32> to vector<1x64xf32>
    %23 = vector.broadcast %22 : vector<1x64xf32> to vector<128x64xf32>
    %24 = arith.addf %20, %23 : vector<128x64xf32>
    %25 = arith.truncf %24 : vector<128x64xf32> to vector<128x64xbf16>
    %c0_22 = arith.constant 0 : index
    %c0_23 = arith.constant 0 : index
    %c0_24 = arith.constant 0 : index
    %26 = vector.load %arg7[%c0_22, %c0_23, %c0_24] : memref<1x128x64xbf16, #tpu.memory_space<vmem>>, vector<1x128x64xbf16>
    %27 = vector.shape_cast %26 : vector<1x128x64xbf16> to vector<128x64xbf16>
    %28 = vector.shape_cast %25 : vector<128x64xbf16> to vector<1x128x64xbf16>
    tpu.vector_store %arg7[%c0_22, %c0_23, %c0_24], %28 {strides = array<i32>} : memref<1x128x64xbf16, #tpu.memory_space<vmem>>, vector<1x128x64xbf16>,
    %c2 = arith.constant 2 : index
    %c0_25 = arith.constant 0 : index
    %c0_26 = arith.constant 0 : index
    %29 = vector.load %arg5[%c2, %c0_25, %c0_26] : memref<3x64x64xbf16, #tpu.memory_space<vmem>>, vector<1x64x64xbf16>
    %30 = vector.shape_cast %29 : vector<1x64x64xbf16> to vector<64x64xbf16>
    %cst_27 = arith.constant dense<0.000000e+00> : vector<128x64xf32>
    %31 = tpu.matmul %6, %30, %cst_27 {dimension_numbers = #tpu.dot_dimension_numbers<[1], [0], [0], [1], [0, 0, 1, 1], [], []>} : vector<128x64xbf16>, vector<64x64xbf16>, vector<128x64xf32> -> vector<128x64xf32>
    %c0_28 = arith.constant 0 : index
    %c2_29 = arith.constant 2 : index
    %c0_30 = arith.constant 0 : index
    %c0_31 = arith.constant 0 : index
    %32 = vector.load %arg4[%c0_28, %c2_29, %c0_30, %c0_31] : memref<1x3x1x64xf32, #tpu.memory_space<vmem>>, vector<1x1x1x64xf32>
    %33 = vector.shape_cast %32 : vector<1x1x1x64xf32> to vector<1x64xf32>
    %34 = vector.broadcast %33 : vector<1x64xf32> to vector<128x64xf32>
    %35 = arith.addf %31, %34 : vector<128x64xf32>
    %36 = arith.truncf %35 : vector<128x64xf32> to vector<128x64xbf16>
    %c0_32 = arith.constant 0 : index
    %c0_33 = arith.constant 0 : index
    %c0_34 = arith.constant 0 : index
    %37 = vector.load %arg8[%c0_32, %c0_33, %c0_34] : memref<1x128x64xbf16, #tpu.memory_space<vmem>>, vector<1x128x64xbf16>
    %38 = vector.shape_cast %37 : vector<1x128x64xbf16> to vector<128x64xbf16>
    %39 = vector.shape_cast %36 : vector<128x64xbf16> to vector<1x128x64xbf16>
    tpu.vector_store %arg8[%c0_32, %c0_33, %c0_34], %39 {strides = array<i32>} : memref<1x128x64xbf16, #tpu.memory_space<vmem>>, vector<1x128x64xbf16>,
    return
  }
  func.func @transform_0(%arg0: i32, %arg1: i32) -> (i32, i32, i32) {
    %c0_i32 = arith.constant 0 : i32
    %c0_i32_0 = arith.constant 0 : i32
    return %arg0, %arg1, %c0_i32 : i32, i32, i32
  }
  func.func @transform_1(%arg0: i32, %arg1: i32) -> (i32, i32, i32) {
    %c0_i32 = arith.constant 0 : i32
    %c0_i32_0 = arith.constant 0 : i32
    %c0_i32_1 = arith.constant 0 : i32
    return %arg0, %c0_i32, %c0_i32_0 : i32, i32, i32
  }
  func.func @transform_2(%arg0: i32, %arg1: i32) -> (i32, i32, i32, i32) {
    %c0_i32 = arith.constant 0 : i32
    %c0_i32_0 = arith.constant 0 : i32
    %c0_i32_1 = arith.constant 0 : i32
    %c0_i32_2 = arith.constant 0 : i32
    return %arg0, %c0_i32, %c0_i32_0, %c0_i32_1 : i32, i32, i32, i32
  }
  func.func @transform_3(%arg0: i32, %arg1: i32) -> (i32, i32, i32) {
    %c0_i32 = arith.constant 0 : i32
    %c0_i32_0 = arith.constant 0 : i32
    %c0_i32_1 = arith.constant 0 : i32
    %c0_i32_2 = arith.constant 0 : i32
    return %c0_i32, %c0_i32_0, %c0_i32_1 : i32, i32, i32
  }
  func.func @transform_4(%arg0: i32, %arg1: i32) -> (i32, i32, i32) {
    %c0_i32 = arith.constant 0 : i32
    %c0_i32_0 = arith.constant 0 : i32
    return %arg0, %arg1, %c0_i32 : i32, i32, i32
  }
  func.func @transform_5(%arg0: i32, %arg1: i32) -> (i32, i32, i32) {
    %c0_i32 = arith.constant 0 : i32
    %c0_i32_0 = arith.constant 0 : i32
    return %arg0, %arg1, %c0_i32 : i32, i32, i32
  }
  func.func @transform_6(%arg0: i32, %arg1: i32) -> (i32, i32, i32) {
    %c0_i32 = arith.constant 0 : i32
    %c0_i32_0 = arith.constant 0 : i32
    return %arg0, %arg1, %c0_i32 : i32, i32, i32
  }
}

</mosaic_0001>

<llo_original>
// kernel: tpu_custom_call.1
$region0: #{tpu_custom_call.1}
  #allocation0 [shape = 'u32[]', space=smem, size = 0x4, offset = 0x4, fixed_abs, tag = 'smem constant byte address 0x4 - core index']
  #allocation1 [shape = 'u32[144,128]{1,0:T(1,128)}', space=vmem, size = 0x12000, scoped, tag = 'internal scratch']
  %s0 = inlined_call_operand.vmem [shape: f32[2,256,64], index: 0, kind: input, shape index: {}]
  %s1 = inlined_call_operand.vmem [shape: f32[2,1,64], index: 1, kind: input, shape index: {}]
  %s2 = inlined_call_operand.vmem [shape: f32[2,3,1,64], index: 2, kind: input, shape index: {}]
  %s3 = inlined_call_operand.vmem [shape: bf16[3,64,64], index: 3, kind: input, shape index: {}]
  %s4 = inlined_call_operand.vmem [shape: bf16[2,256,64], index: 4, kind: output, shape index: {0}]
  %s5 = inlined_call_operand.vmem [shape: bf16[2,256,64], index: 5, kind: output, shape index: {1}]
  %s6 = inlined_call_operand.vmem [shape: bf16[2,256,64], index: 6, kind: output, shape index: {2}]
  %7 = xla_tuple %s4, %s5, %s6
  %s8 = sld [smem:[#allocation0]]
  $region65: #{tpu_custom_call.1} parent=0
    _
  %s10 = ssub.s32 1, %s8
  %s11 = scalar_select 0, %s10, %s8
  loop: start=0, step=1, limit=6
  $region2: #{tpu_custom_call.1} parent=0 // loop_pre_header
    _
  $region3: #{tpu_custom_call.1} parent=0 // loop_header
    %s13 = sphi 0, %s17
    %p14 = scmp.ge.s32.totalorder %s13, 6
    %s20 = sphi 0, %s32
    %s21 = sphi 0, %s28
    %s22 = sphi 0, %s20
    %s23 = sphi 0, %s21
    %s24 = sphi 0, %s22
    %s25 = sphi 0, %s23
    %s37 = sphi 0, %s39
    %s40 = sphi 0, %s37
    %s41 = sphi 0, %s40
    %s57 = sphi 0, %s41
    %s63 = sphi 0, %s65
    %s66 = sphi 0, %s63
    %s67 = sphi 0, %s66
    %s83 = sphi 0, %s67
    %s89 = sphi 0, %s91
    %s92 = sphi 0, %s89
    %s93 = sphi 0, %s92
    %s109 = sphi 0, %s93
    %s113 = sphi 0, %s113
    %s115 = sphi 0, %s113
    %s116 = sphi 0, %s115
    %s130 = sphi 0, %s116
    %s138 = sphi 0, %s140
    %s141 = sphi 0, %s138
    %s142 = sphi 0, %s141
    %s158 = sphi 0, %s142
    %s166 = sphi 0, %s168
    %s169 = sphi 0, %s166
    %s170 = sphi 0, %s169
    %s186 = sphi 0, %s170
    %s194 = sphi 0, %s196
    %s197 = sphi 0, %s194
    %s198 = sphi 0, %s197
    %s214 = sphi 0, %s198
  $region4: #{tpu_custom_call.1} parent=0 // loop_header_branch
    %16 = sbr.rel (%p14) target = $region8
  $region5: #{tpu_custom_call.1} parent=0 // loop_body
    %s18 = ssub.s32 %s13, 1
    %s19 = ssub.s32 %s13, 2
    %s26 = sadd.s32 1, %s21
    %p27 = scmp.ge.s32.totalorder %s26, 2
    %s28 = scalar_select %p27, 0, %s26
    %s29 = sadd.s32 1, %s20
    %s30 = scalar_select %p27, %s29, %s20
    %p31 = scmp.ge.s32.totalorder %s30, 2
    %s32 = scalar_select %p31, 0, %s30
    %s33 = ssub.s32 %s20, %s32
    %s34 = ssub.s32 %s21, %s28
    %s35 = sor.u32 %s33, %s34
    %p36 = scmp.eq.s32.totalorder %s35, 0
    %s38 = sadd.s32 %s37, 1
    %s39 = scalar_select %p36, %s37, %s38
    %p42 = pneg %p36
    %p43 = scmp.eq.s32.totalorder %s13, 3
    %p44 = por %p42, %p43
    %p45 = scmp.ne.s32.totalorder %s37, %s40
    %p46 = scmp.eq.s32.totalorder %s13, 0
    %p47 = por %p45, %p46
    %p48 = scmp.ne.s32.totalorder %s37, %s40
    %p49 = scmp.eq.s32.totalorder %s18, 3
    %p50 = por %p48, %p49
    %p51 = scmp.ne.s32.totalorder %s40, %s41
    %p52 = scmp.eq.s32.totalorder %s18, 0
    %p53 = por %p51, %p52
    %p54 = scmp.ne.s32.totalorder %s40, %s41
    %p55 = scmp.eq.s32.totalorder %s19, 3
    %p56 = por %p54, %p55
    %p58 = scmp.ne.s32.totalorder %s41, %s57
    %p59 = scmp.eq.s32.totalorder %s19, 0
    %p60 = por %p58, %p59
    %s61 = ssub.s32 %s20, %s32
    %p62 = scmp.eq.s32.totalorder %s61, 0
    %s64 = sadd.s32 %s63, 1
    %s65 = scalar_select %p62, %s63, %s64
    %p68 = pneg %p62
    %p69 = scmp.eq.s32.totalorder %s13, 3
    %p70 = por %p68, %p69
    %p71 = scmp.ne.s32.totalorder %s63, %s66
    %p72 = scmp.eq.s32.totalorder %s13, 0
    %p73 = por %p71, %p72
    %p74 = scmp.ne.s32.totalorder %s63, %s66
    %p75 = scmp.eq.s32.totalorder %s18, 3
    %p76 = por %p74, %p75
    %p77 = scmp.ne.s32.totalorder %s66, %s67
    %p78 = scmp.eq.s32.totalorder %s18, 0
    %p79 = por %p77, %p78
    %p80 = scmp.ne.s32.totalorder %s66, %s67
    %p81 = scmp.eq.s32.totalorder %s19, 3
    %p82 = por %p80, %p81
    %p84 = scmp.ne.s32.totalorder %s67, %s83
    %p85 = scmp.eq.s32.totalorder %s19, 0
    %p86 = por %p84, %p85
    %s87 = ssub.s32 %s20, %s32
    %p88 = scmp.eq.s32.totalorder %s87, 0
    %s90 = sadd.s32 %s89, 1
    %s91 = scalar_select %p88, %s89, %s90
    %p94 = pneg %p88
    %p95 = scmp.eq.s32.totalorder %s13, 3
    %p96 = por %p94, %p95
    %p97 = scmp.ne.s32.totalorder %s89, %s92
    %p98 = scmp.eq.s32.totalorder %s13, 0
    %p99 = por %p97, %p98
    %p100 = scmp.ne.s32.totalorder %s89, %s92
    %p101 = scmp.eq.s32.totalorder %s18, 3
    %p102 = por %p100, %p101
    %p103 = scmp.ne.s32.totalorder %s92, %s93
    %p104 = scmp.eq.s32.totalorder %s18, 0
    %p105 = por %p103, %p104
    %p106 = scmp.ne.s32.totalorder %s92, %s93
    %p107 = scmp.eq.s32.totalorder %s19, 3
    %p108 = por %p106, %p107
    %p110 = scmp.ne.s32.totalorder %s93, %s109
    %p111 = scmp.eq.s32.totalorder %s19, 0
    %p112 = por %p110, %p111
    %s114 = sadd.s32 %s113, 1
    %p117 = scmp.eq.s32.totalorder %s13, 3
    %p118 = scmp.ne.s32.totalorder %s113, %s115
    %p119 = scmp.eq.s32.totalorder %s13, 0
    %p120 = por %p118, %p119
    %p121 = scmp.ne.s32.totalorder %s113, %s115
    %p122 = scmp.eq.s32.totalorder %s18, 3
    %p123 = por %p121, %p122
    %p124 = scmp.ne.s32.totalorder %s115, %s116
    %p125 = scmp.eq.s32.totalorder %s18, 0
    %p126 = por %p124, %p125
    %p127 = scmp.ne.s32.totalorder %s115, %s116
    %p128 = scmp.eq.s32.totalorder %s19, 3
    %p129 = por %p127, %p128
    %p131 = scmp.ne.s32.totalorder %s116, %s130
    %p132 = scmp.eq.s32.totalorder %s19, 0
    %p133 = por %p131, %p132
    %s134 = ssub.s32 %s20, %s32
    %s135 = ssub.s32 %s21, %s28
    %s136 = sor.u32 %s134, %s135
    %p137 = scmp.eq.s32.totalorder %s136, 0
    %s139 = sadd.s32 %s138, 1
    %s140 = scalar_select %p137, %s138, %s139
    %p143 = pneg %p137
    %p144 = scmp.eq.s32.totalorder %s13, 3
    %p145 = por %p143, %p144
    %p146 = scmp.ne.s32.totalorder %s138, %s141
    %p147 = scmp.eq.s32.totalorder %s13, 0
    %p148 = por %p146, %p147
    %p149 = scmp.ne.s32.totalorder %s138, %s141
    %p150 = scmp.eq.s32.totalorder %s18, 3
    %p151 = por %p149, %p150
    %p152 = scmp.ne.s32.totalorder %s141, %s142
    %p153 = scmp.eq.s32.totalorder %s18, 0
    %p154 = por %p152, %p153
    %p155 = scmp.ne.s32.totalorder %s141, %s142
    %p156 = scmp.eq.s32.totalorder %s19, 3
    %p157 = por %p155, %p156
    %p159 = scmp.ne.s32.totalorder %s142, %s158
    %p160 = scmp.eq.s32.totalorder %s19, 0
    %p161 = por %p159, %p160
    %s162 = ssub.s32 %s20, %s32
    %s163 = ssub.s32 %s21, %s28
    %s164 = sor.u32 %s162, %s163
    %p165 = scmp.eq.s32.totalorder %s164, 0
    %s167 = sadd.s32 %s166, 1
    %s168 = scalar_select %p165, %s166, %s167
    %p171 = pneg %p165
    %p172 = scmp.eq.s32.totalorder %s13, 3
    %p173 = por %p171, %p172
    %p174 = scmp.ne.s32.totalorder %s166, %s169
    %p175 = scmp.eq.s32.totalorder %s13, 0
    %p176 = por %p174, %p175
    %p177 = scmp.ne.s32.totalorder %s166, %s169
    %p178 = scmp.eq.s32.totalorder %s18, 3
    %p179 = por %p177, %p178
    %p180 = scmp.ne.s32.totalorder %s169, %s170
    %p181 = scmp.eq.s32.totalorder %s18, 0
    %p182 = por %p180, %p181
    %p183 = scmp.ne.s32.totalorder %s169, %s170
    %p184 = scmp.eq.s32.totalorder %s19, 3
    %p185 = por %p183, %p184
    %p187 = scmp.ne.s32.totalorder %s170, %s186
    %p188 = scmp.eq.s32.totalorder %s19, 0
    %p189 = por %p187, %p188
    %s190 = ssub.s32 %s20, %s32
    %s191 = ssub.s32 %s21, %s28
    %s192 = sor.u32 %s190, %s191
    %p193 = scmp.eq.s32.totalorder %s192, 0
    %s195 = sadd.s32 %s194, 1
    %s196 = scalar_select %p193, %s194, %s195
    %p199 = pneg %p193
    %p200 = scmp.eq.s32.totalorder %s13, 3
    %p201 = por %p199, %p200
    %p202 = scmp.ne.s32.totalorder %s194, %s197
    %p203 = scmp.eq.s32.totalorder %s13, 0
    %p204 = por %p202, %p203
    %p205 = scmp.ne.s32.totalorder %s194, %s197
    %p206 = scmp.eq.s32.totalorder %s18, 3
    %p207 = por %p205, %p206
    %p208 = scmp.ne.s32.totalorder %s197, %s198
    %p209 = scmp.eq.s32.totalorder %s18, 0
    %p210 = por %p208, %p209
    %p211 = scmp.ne.s32.totalorder %s197, %s198
    %p212 = scmp.eq.s32.totalorder %s19, 3
    %p213 = por %p211, %p212
    %p215 = scmp.ne.s32.totalorder %s198, %s214
    %p216 = scmp.eq.s32.totalorder %s19, 0
    %p217 = por %p215, %p216
    %p218 = scmp.le.s32.totalorder 1, %s13
    %p219 = scmp.lt.s32.totalorder %s13, 5
    %p220 = pnand %p218, %p219
    %p221 = pneg %p220
    // Predicated region
    $region9: #{tpu_custom_call.1} parent=5 // pred_check
      _
    $region10: #{tpu_custom_call.1} parent=5 // pred_check_branch
      %223 = sbr.rel (%p220) target = $region12
    $region11: #{tpu_custom_call.1} parent=5 // pred_region
      %s224 = ssub.s32 %s13, 1
      // Predicated region
      $region13: #{tpu_custom_call.1} parent=11 // pred_check
        %p225 = pneg %p126
      $region14: #{tpu_custom_call.1} parent=11 // pred_check_branch
        %227 = sbr.rel (%p225) target = $region16
      $region15: #{tpu_custom_call.1} parent=11 // pred_region
        _
      $region16: #{tpu_custom_call.1} parent=11 // pred_fallthru
        _
    $region12: #{tpu_custom_call.1} parent=5 // pred_fallthru
      _
    %p228 = scmp.lt.s32.totalorder %s13, 4
    // Predicated region
    $region17: #{tpu_custom_call.1} parent=5 // pred_check
      %p229 = pneg %p228
    $region18: #{tpu_custom_call.1} parent=5 // pred_check_branch
      %231 = sbr.rel (%p229) target = $region20
    $region19: #{tpu_custom_call.1} parent=5 // pred_region
      // Predicated region
      $region21: #{tpu_custom_call.1} parent=19 // pred_check
        %p232 = pneg %p47
      $region22: #{tpu_custom_call.1} parent=19 // pred_check_branch
        %234 = sbr.rel (%p232) target = $region24
      $region23: #{tpu_custom_call.1} parent=19 // pred_region
        %s235 = smul.u32 16, %s21
        %p236 = scmp.lt.s32.totalorder %s20, 1
        %s237 = scalar_select %p236, %s20, 1
        %p238 = scmp.lt.s32.totalorder %s235, 31
        %s239 = scalar_select %p238, %s235, 31
        %s240 = smul.addr %s237, 32
        %s241 = sadd.s32 %s239, %s240
        %s242 = smul.addr %s241, 8
        %s243 = scalar_lea.vmem %s0, %s242
        %s244 = smul.u32 16, %s21
      $region24: #{tpu_custom_call.1} parent=19 // pred_fallthru
        _
      // Predicated region
      $region25: #{tpu_custom_call.1} parent=19 // pred_check
        %p245 = pneg %p73
      $region26: #{tpu_custom_call.1} parent=19 // pred_check_branch
        %247 = sbr.rel (%p245) target = $region28
      $region27: #{tpu_custom_call.1} parent=19 // pred_region
        %p248 = scmp.lt.s32.totalorder %s20, 1
        %s249 = scalar_select %p248, %s20, 1
        %s250 = scalar_lea.vmem %s1, %s249
      $region28: #{tpu_custom_call.1} parent=19 // pred_fallthru
        _
      // Predicated region
      $region29: #{tpu_custom_call.1} parent=19 // pred_check
        %p251 = pneg %p99
      $region30: #{tpu_custom_call.1} parent=19 // pred_check_branch
        %253 = sbr.rel (%p251) target = $region32
      $region31: #{tpu_custom_call.1} parent=19 // pred_region
        %p254 = scmp.lt.s32.totalorder %s20, 1
        %s255 = scalar_select %p254, %s20, 1
        %s256 = smul.addr %s255, 3
        %s257 = scalar_lea.vmem %s2, %s256
      $region32: #{tpu_custom_call.1} parent=19 // pred_fallthru
        _
    $region20: #{tpu_custom_call.1} parent=5 // pred_fallthru
      _
    %p258 = scmp.le.s32.totalorder 1, %s13
    %p259 = scmp.lt.s32.totalorder %s13, 5
    %p260 = pnand %p258, %p259
    %p261 = pneg %p260
    // Predicated region
    $region33: #{tpu_custom_call.1} parent=5 // pred_check
      _
    $region34: #{tpu_custom_call.1} parent=5 // pred_check_branch
      %263 = sbr.rel (%p260) target = $region36
    $region35: #{tpu_custom_call.1} parent=5 // pred_region
      %s264 = ssub.s32 %s13, 1
      %s265 = smul.u32 16, %s23
      %p266 = scmp.lt.s32.totalorder %s22, 1
      %s267 = scalar_select %p266, %s22, 1
      %p268 = scmp.lt.s32.totalorder %s265, 31
      %s269 = scalar_select %p268, %s265, 31
      %s270 = smul.addr %s267, 32
      %s271 = sadd.s32 %s269, %s270
      %s272 = smul.addr %s271, 8
      %s273 = scalar_lea.vmem %s0, %s272
      %p274 = pneg %p53
      %p275 = pneg %p50
      %p276 = scmp.lt.s32.totalorder %s22, 1
      %s277 = scalar_select %p276, %s22, 1
      %s278 = scalar_lea.vmem %s1, %s277
      %p279 = pneg %p79
      %p280 = pneg %p76
      %p281 = scmp.lt.s32.totalorder %s22, 1
      %s282 = scalar_select %p281, %s22, 1
      %s283 = smul.addr %s282, 3
      %s284 = scalar_lea.vmem %s2, %s283
      %p285 = pneg %p105
      %p286 = pneg %p102
      %p287 = pneg %p126
      %p288 = pneg %p123
      %p289 = pneg %p154
      %p290 = pneg %p151
      %s291 = smul.u32 16, %s23
      %p292 = scmp.lt.s32.totalorder %s22, 1
      %s293 = scalar_select %p292, %s22, 1
      %p294 = scmp.lt.s32.totalorder %s291, 31
      %s295 = scalar_select %p294, %s291, 31
      %s296 = smul.addr %s293, 32
      %s297 = sadd.s32 %s295, %s296
      %s298 = smul.addr %s297, 4
      %s299 = scalar_lea.vmem %s4, %s298
      %p300 = pneg %p182
      %p301 = pneg %p179
      %s302 = smul.u32 16, %s23
      %p303 = scmp.lt.s32.totalorder %s22, 1
      %s304 = scalar_select %p303, %s22, 1
      %p305 = scmp.lt.s32.totalorder %s302, 31
      %s306 = scalar_select %p305, %s302, 31
      %s307 = smul.addr %s304, 32
      %s308 = sadd.s32 %s306, %s307
      %s309 = smul.addr %s308, 4
      %s310 = scalar_lea.vmem %s5, %s309
      %p311 = pneg %p210
      %p312 = pneg %p207
      %s313 = smul.u32 16, %s23
      %p314 = scmp.lt.s32.totalorder %s22, 1
      %s315 = scalar_select %p314, %s22, 1
      %p316 = scmp.lt.s32.totalorder %s313, 31
      %s317 = scalar_select %p316, %s313, 31
      %s318 = smul.addr %s315, 32
      %s319 = sadd.s32 %s317, %s318
      %s320 = smul.addr %s319, 4
      %s321 = scalar_lea.vmem %s6, %s320
      %s322 = smul.u32 16, %s23
      %p323 = scmp.lt.s32.totalorder %s22, 1
      %s324 = scalar_select %p323, %s22, 1
      %p325 = scmp.lt.s32.totalorder %s322, 31
      %s326 = scalar_select %p325, %s322, 31
      %s327 = smul.addr %s324, 32
      %s328 = sadd.s32 %s326, %s327
      %s329 = smul.addr %s328, 8
      %s330 = scalar_lea.vmem %s0, %s329
      %s331 = smul.u32 16, %s23
      %p332 = scmp.lt.s32.totalorder %s22, 1
      %s333 = scalar_select %p332, %s22, 1
      %s334 = scalar_lea.vmem %s1, %s333
      %p335 = scmp.lt.s32.totalorder %s22, 1
      %s336 = scalar_select %p335, %s22, 1
      %s337 = smul.addr %s336, 3
      %s338 = scalar_lea.vmem %s2, %s337
      %s339 = smul.u32 16, %s23
      %p340 = scmp.lt.s32.totalorder %s22, 1
      %s341 = scalar_select %p340, %s22, 1
      %p342 = scmp.lt.s32.totalorder %s339, 31
      %s343 = scalar_select %p342, %s339, 31
      %s344 = smul.addr %s341, 32
      %s345 = sadd.s32 %s343, %s344
      %s346 = smul.addr %s345, 4
      %s347 = scalar_lea.vmem %s4, %s346
      %s348 = smul.u32 16, %s23
      %s349 = smul.u32 16, %s23
      %p350 = scmp.lt.s32.totalorder %s22, 1
      %s351 = scalar_select %p350, %s22, 1
      %p352 = scmp.lt.s32.totalorder %s349, 31
      %s353 = scalar_select %p352, %s349, 31
      %s354 = smul.addr %s351, 32
      %s355 = sadd.s32 %s353, %s354
      %s356 = smul.addr %s355, 4
      %s357 = scalar_lea.vmem %s5, %s356
      %s358 = smul.u32 16, %s23
      %s359 = smul.u32 16, %s23
      %p360 = scmp.lt.s32.totalorder %s22, 1
      %s361 = scalar_select %p360, %s22, 1
      %p362 = scmp.lt.s32.totalorder %s359, 31
      %s363 = scalar_select %p362, %s359, 31
      %s364 = smul.addr %s361, 32
      %s365 = sadd.s32 %s363, %s364
      %s366 = smul.addr %s365, 4
      %s367 = scalar_lea.vmem %s6, %s366
      %s368 = smul.u32 16, %s23
      %v370 = vld [vmem:[%s330] sm:$0xff]
      %v371 = vld [vmem:[%s330 + $0x8] sm:$0xff]
      %v372 = vld [vmem:[%s330 + $0x10] sm:$0xff]
      %v373 = vld [vmem:[%s330 + $0x18] sm:$0xff]
      %v374 = vld [vmem:[%s330 + $0x20] sm:$0xff]
      %v375 = vld [vmem:[%s330 + $0x28] sm:$0xff]
      %v376 = vld [vmem:[%s330 + $0x30] sm:$0xff]
      %v377 = vld [vmem:[%s330 + $0x38] sm:$0xff]
      %v378 = vld [vmem:[%s330 + $0x40] sm:$0xff]
      %v379 = vld [vmem:[%s330 + $0x48] sm:$0xff]
      %v380 = vld [vmem:[%s330 + $0x50] sm:$0xff]
      %v381 = vld [vmem:[%s330 + $0x58] sm:$0xff]
      %v382 = vld [vmem:[%s330 + $0x60] sm:$0xff]
      %v383 = vld [vmem:[%s330 + $0x68] sm:$0xff]
      %v384 = vld [vmem:[%s330 + $0x70] sm:$0xff]
      %v385 = vld [vmem:[%s330 + $0x78] sm:$0xff]
      %v386 = vld [vmem:[%s334] sm:$0x1]
      %v388 = vlaneseq
      %v389 = vshrl.u32 %v388, 7
      %v390 = vsub.s32 0, %v389
      %v391 = vrot.slane %v386, %v390
      %v393 = vmul.f32 %v370, %v391
      %v394 = vmul.f32 %v371, %v391
      %v395 = vmul.f32 %v372, %v391
      %v396 = vmul.f32 %v373, %v391
      %v397 = vmul.f32 %v374, %v391
      %v398 = vmul.f32 %v375, %v391
      %v399 = vmul.f32 %v376, %v391
      %v400 = vmul.f32 %v377, %v391
      %v401 = vmul.f32 %v378, %v391
      %v402 = vmul.f32 %v379, %v391
      %v403 = vmul.f32 %v380, %v391
      %v404 = vmul.f32 %v381, %v391
      %v405 = vmul.f32 %v382, %v391
      %v406 = vmul.f32 %v383, %v391
      %v407 = vmul.f32 %v384, %v391
      %v408 = vmul.f32 %v385, %v391
      %v409 = vpack.c.bf16 %v394, %v393
      %v410 = vpack.c.bf16 %v396, %v395
      %v411 = vpack.c.bf16 %v398, %v397
      %v412 = vpack.c.bf16 %v400, %v399
      %v413 = vpack.c.bf16 %v402, %v401
      %v414 = vpack.c.bf16 %v404, %v403
      %v415 = vpack.c.bf16 %v406, %v405
      %v416 = vpack.c.bf16 %v408, %v407
      %v417 = vld [vmem:[%s3] sm:$0xf]
      %v418 = vld [vmem:[%s3 + $0x4] sm:$0xf]
      %v419 = vld [vmem:[%s3 + $0x8] sm:$0xf]
      %v420 = vld [vmem:[%s3 + $0xc] sm:$0xf]
      %v421 = vld [vmem:[%s3 + $0x10] sm:$0xf]
      %v422 = vld [vmem:[%s3 + $0x14] sm:$0xf]
      %v423 = vld [vmem:[%s3 + $0x18] sm:$0xf]
      %v424 = vld [vmem:[%s3 + $0x1c] sm:$0xf]
      %v425 = vld [vmem:[%s338] sm:$0x1]
      %v427 = vlaneseq
      %v428 = vshrl.u32 %v427, 7
      %v429 = vsub.s32 0, %v428
      %v430 = vrot.slane %v425, %v429
      %v440 = vunpack.c.l.b16 %v417
      %v441 = vunpack.c.l.b16 %v418
      %v442 = vunpack.c.l.b16 %v419
      %v443 = vunpack.c.l.b16 %v420
      %v444 = vunpack.c.l.b16 %v421
      %v445 = vunpack.c.l.b16 %v422
      %v446 = vunpack.c.l.b16 %v423
      %v447 = vunpack.c.l.b16 %v424
      %v448 = vpack.c.b16 %v441, %v440
      %v449 = vpack.c.b16 %v443, %v442
      %v450 = vpack.c.b16 %v445, %v444
      %v451 = vpack.c.b16 %v447, %v446
      %vm456 = vcmask 523264
      %v458 = vsel %vm456, %v409, 0
      %v461 = vsel %vm456, %v410, 0
      %v464 = vsel %vm456, %v411, 0
      %v467 = vsel %vm456, %v412, 0
      %v470 = vsel %vm456, %v413, 0
      %v473 = vsel %vm456, %v414, 0
      %v476 = vsel %vm456, %v415, 0
      %v479 = vsel %vm456, %v416, 0
      %481 = vmatprep.subr.bf16.mxu0 0
      %482 = vmatpush1.bf16.msra.mxu0 0
      %483 = vmatprep.subr.bf16.mxu0 0
      %484 = vmatpush1.bf16.msra.mxu0 0
      %485 = vmatprep.subr.bf16.mxu0 0
      %486 = vmatpush1.bf16.msra.mxu0 0
      %487 = vmatprep.subr.bf16.mxu0 0
      %488 = vmatpush1.bf16.msra.mxu0 0
      %489 = vmatprep.subr.bf16.mxu0 0
      %490 = vmatpush1.bf16.msra.mxu0 %v451
      %491 = vmatprep.subr.bf16.mxu0 0
      %492 = vmatpush1.bf16.msra.mxu0 %v450
      %493 = vmatprep.subr.bf16.mxu0 0
      %494 = vmatpush1.bf16.msra.mxu0 %v449
      %495 = vmatprep.subr.bf16.mxu0 0
      %496 = vmatpush1.bf16.msra.mxu0 %v448
      %497 = vmatprep.subr.bf16.mxu0 0
      %498 = vmatpush2.bf16.msra.mxu0 0
      %499 = vmatprep.subr.bf16.mxu0 0
      %500 = vmatpush2.bf16.msra.mxu0 0
      %501 = vmatprep.subr.bf16.mxu0 0
      %502 = vmatpush2.bf16.msra.mxu0 0
      %503 = vmatprep.subr.bf16.mxu0 0
      %504 = vmatpush2.bf16.msra.mxu0 0
      %505 = vmatprep.subr.bf16.mxu0 0
      %506 = vmatpush2.bf16.msra.mxu0 0
      %507 = vmatprep.subr.bf16.mxu0 0
      %508 = vmatpush2.bf16.msra.mxu0 0
      %509 = vmatprep.subr.bf16.mxu0 0
      %510 = vmatpush2.bf16.msra.mxu0 0
      %511 = vmatprep.subr.bf16.mxu0 0
      %512 = vmatpush2.bf16.msra.mxu0 0
      %513 = vmatprep.mubr.bf16.mxu0 0
      %514 = vmatmul.mubr.bf16.gmra.mxu0 %v458
      %v515 = vpop.f32.mrf.mxu0
      %v516 = vadd.f32 %v430, %v515
      %v517 = vpop.f32.mrf.mxu0
      %v518 = vpop.f32.mrf.mxu0
      %v519 = vadd.f32 %v430, %v518
      %v520 = vpop.f32.mrf.mxu0
      %521 = vmatprep.mubr.bf16.mxu0 0
      %522 = vmatmul.mubr.bf16.gmra.mxu0 %v461
      %v523 = vpop.f32.mrf.mxu0
      %v524 = vadd.f32 %v430, %v523
      %v525 = vpop.f32.mrf.mxu0
      %v526 = vpop.f32.mrf.mxu0
      %v527 = vadd.f32 %v430, %v526
      %v528 = vpop.f32.mrf.mxu0
      %529 = vmatprep.mubr.bf16.mxu0 0
      %530 = vmatmul.mubr.bf16.gmra.mxu0 %v464
      %v531 = vpop.f32.mrf.mxu0
      %v532 = vadd.f32 %v430, %v531
      %v533 = vpop.f32.mrf.mxu0
      %v534 = vpop.f32.mrf.mxu0
      %v535 = vadd.f32 %v430, %v534
      %v536 = vpop.f32.mrf.mxu0
      %537 = vmatprep.mubr.bf16.mxu0 0
      %538 = vmatmul.mubr.bf16.gmra.mxu0 %v467
      %v539 = vpop.f32.mrf.mxu0
      %v540 = vadd.f32 %v430, %v539
      %v541 = vpop.f32.mrf.mxu0
      %v542 = vpop.f32.mrf.mxu0
      %v543 = vadd.f32 %v430, %v542
      %v544 = vpop.f32.mrf.mxu0
      %545 = vmatprep.mubr.bf16.mxu0 0
      %546 = vmatmul.mubr.bf16.gmra.mxu0 %v470
      %v547 = vpop.f32.mrf.mxu0
      %v548 = vadd.f32 %v430, %v547
      %v549 = vpop.f32.mrf.mxu0
      %v550 = vpop.f32.mrf.mxu0
      %v551 = vadd.f32 %v430, %v550
      %v552 = vpop.f32.mrf.mxu0
      %553 = vmatprep.mubr.bf16.mxu0 0
      %554 = vmatmul.mubr.bf16.gmra.mxu0 %v473
      %v555 = vpop.f32.mrf.mxu0
      %v556 = vadd.f32 %v430, %v555
      %v557 = vpop.f32.mrf.mxu0
      %v558 = vpop.f32.mrf.mxu0
      %v559 = vadd.f32 %v430, %v558
      %v560 = vpop.f32.mrf.mxu0
      %561 = vmatprep.mubr.bf16.mxu0 0
      %562 = vmatmul.mubr.bf16.gmra.mxu0 %v476
      %v563 = vpop.f32.mrf.mxu0
      %v564 = vadd.f32 %v430, %v563
      %v565 = vpop.f32.mrf.mxu0
      %v566 = vpop.f32.mrf.mxu0
      %v567 = vadd.f32 %v430, %v566
      %v568 = vpop.f32.mrf.mxu0
      %569 = vmatprep.mubr.bf16.mxu0 0
      %570 = vmatmul.mubr.bf16.gmra.mxu0 %v479
      %v571 = vpop.f32.mrf.mxu0
      %v572 = vadd.f32 %v430, %v571
      %v573 = vpop.f32.mrf.mxu0
      %v574 = vpop.f32.mrf.mxu0
      %v575 = vadd.f32 %v430, %v574
      %v576 = vpop.f32.mrf.mxu0
      %577 = vdwg.mxu0
      %v578 = vpack.c.bf16 %v519, %v516
      %v579 = vpack.c.bf16 %v527, %v524
      %v580 = vpack.c.bf16 %v535, %v532
      %v581 = vpack.c.bf16 %v543, %v540
      %v582 = vpack.c.bf16 %v551, %v548
      %v583 = vpack.c.bf16 %v559, %v556
      %v584 = vpack.c.bf16 %v567, %v564
      %v585 = vpack.c.bf16 %v575, %v572
      %v594 = vunpack.c.l.b16 %v578
      %v595 = vunpack.c.h.b16 %v578
      %v596 = vunpack.c.l.b16 %v579
      %v597 = vunpack.c.h.b16 %v579
      %v598 = vunpack.c.l.b16 %v580
      %v599 = vunpack.c.h.b16 %v580
      %v600 = vunpack.c.l.b16 %v581
      %v601 = vunpack.c.h.b16 %v581
      %v602 = vunpack.c.l.b16 %v582
      %v603 = vunpack.c.h.b16 %v582
      %v604 = vunpack.c.l.b16 %v583
      %v605 = vunpack.c.h.b16 %v583
      %v606 = vunpack.c.l.b16 %v584
      %v607 = vunpack.c.h.b16 %v584
      %v608 = vunpack.c.l.b16 %v585
      %v609 = vunpack.c.h.b16 %v585
      %v610 = vpack.c.b16 %v594, %v594
      %v611 = vpack.c.b16 %v595, %v595
      %v612 = vpack.c.b16 %v596, %v596
      %v613 = vpack.c.b16 %v597, %v597
      %v614 = vpack.c.b16 %v598, %v598
      %v615 = vpack.c.b16 %v599, %v599
      %v616 = vpack.c.b16 %v600, %v600
      %v617 = vpack.c.b16 %v601, %v601
      %v618 = vpack.c.b16 %v602, %v602
      %v619 = vpack.c.b16 %v603, %v603
      %v620 = vpack.c.b16 %v604, %v604
      %v621 = vpack.c.b16 %v605, %v605
      %v622 = vpack.c.b16 %v606, %v606
      %v623 = vpack.c.b16 %v607, %v607
      %v624 = vpack.c.b16 %v608, %v608
      %v625 = vpack.c.b16 %v609, %v609
      %vm642 = vcmask 519168
      %643 = vst.msk [vmem:[%s347] sm:$0xf] %vm642, %v610
      %644 = vst.msk [vmem:[%s347 + $0x4] sm:$0xf] %vm642, %v611
      %645 = vst.msk [vmem:[%s347 + $0x8] sm:$0xf] %vm642, %v612
      %646 = vst.msk [vmem:[%s347 + $0xc] sm:$0xf] %vm642, %v613
      %647 = vst.msk [vmem:[%s347 + $0x10] sm:$0xf] %vm642, %v614
      %648 = vst.msk [vmem:[%s347 + $0x14] sm:$0xf] %vm642, %v615
      %649 = vst.msk [vmem:[%s347 + $0x18] sm:$0xf] %vm642, %v616
      %650 = vst.msk [vmem:[%s347 + $0x1c] sm:$0xf] %vm642, %v617
      %651 = vst.msk [vmem:[%s347 + $0x20] sm:$0xf] %vm642, %v618
      %652 = vst.msk [vmem:[%s347 + $0x24] sm:$0xf] %vm642, %v619
      %653 = vst.msk [vmem:[%s347 + $0x28] sm:$0xf] %vm642, %v620
      %654 = vst.msk [vmem:[%s347 + $0x2c] sm:$0xf] %vm642, %v621
      %655 = vst.msk [vmem:[%s347 + $0x30] sm:$0xf] %vm642, %v622
      %656 = vst.msk [vmem:[%s347 + $0x34] sm:$0xf] %vm642, %v623
      %657 = vst.msk [vmem:[%s347 + $0x38] sm:$0xf] %vm642, %v624
      %658 = vst.msk [vmem:[%s347 + $0x3c] sm:$0xf] %vm642, %v625
      %s659 = scalar_lea.vmem %s3, 32
      %v660 = vld [vmem:[%s659] sm:$0xf]
      %v661 = vld [vmem:[%s659 + $0x4] sm:$0xf]
      %v662 = vld [vmem:[%s659 + $0x8] sm:$0xf]
      %v663 = vld [vmem:[%s659 + $0xc] sm:$0xf]
      %v664 = vld [vmem:[%s659 + $0x10] sm:$0xf]
      %v665 = vld [vmem:[%s659 + $0x14] sm:$0xf]
      %v666 = vld [vmem:[%s659 + $0x18] sm:$0xf]
      %v667 = vld [vmem:[%s659 + $0x1c] sm:$0xf]
      %s668 = scalar_lea.vmem %s338, 1
      %v669 = vld [vmem:[%s668] sm:$0x1]
      %v671 = vlaneseq
      %v672 = vshrl.u32 %v671, 7
      %v673 = vsub.s32 0, %v672
      %v674 = vrot.slane %v669, %v673
      %v684 = vunpack.c.l.b16 %v660
      %v685 = vunpack.c.l.b16 %v661
      %v686 = vunpack.c.l.b16 %v662
      %v687 = vunpack.c.l.b16 %v663
      %v688 = vunpack.c.l.b16 %v664
      %v689 = vunpack.c.l.b16 %v665
      %v690 = vunpack.c.l.b16 %v666
      %v691 = vunpack.c.l.b16 %v667
      %v692 = vpack.c.b16 %v685, %v684
      %v693 = vpack.c.b16 %v687, %v686
      %v694 = vpack.c.b16 %v689, %v688
      %v695 = vpack.c.b16 %v691, %v690
      %700 = vmatprep.subr.bf16.mxu0 0
      %701 = vmatpush1.bf16.msra.mxu0 0
      %702 = vmatprep.subr.bf16.mxu0 0
      %703 = vmatpush1.bf16.msra.mxu0 0
      %704 = vmatprep.subr.bf16.mxu0 0
      %705 = vmatpush1.bf16.msra.mxu0 0
      %706 = vmatprep.subr.bf16.mxu0 0
      %707 = vmatpush1.bf16.msra.mxu0 0
      %708 = vmatprep.subr.bf16.mxu0 0
      %709 = vmatpush1.bf16.msra.mxu0 %v695
      %710 = vmatprep.subr.bf16.mxu0 0
      %711 = vmatpush1.bf16.msra.mxu0 %v694
      %712 = vmatprep.subr.bf16.mxu0 0
      %713 = vmatpush1.bf16.msra.mxu0 %v693
      %714 = vmatprep.subr.bf16.mxu0 0
      %715 = vmatpush1.bf16.msra.mxu0 %v692
      %716 = vmatprep.subr.bf16.mxu0 0
      %717 = vmatpush2.bf16.msra.mxu0 0
      %718 = vmatprep.subr.bf16.mxu0 0
      %719 = vmatpush2.bf16.msra.mxu0 0
      %720 = vmatprep.subr.bf16.mxu0 0
      %721 = vmatpush2.bf16.msra.mxu0 0
      %722 = vmatprep.subr.bf16.mxu0 0
      %723 = vmatpush2.bf16.msra.mxu0 0
      %724 = vmatprep.subr.bf16.mxu0 0
      %725 = vmatpush2.bf16.msra.mxu0 0
      %726 = vmatprep.subr.bf16.mxu0 0
      %727 = vmatpush2.bf16.msra.mxu0 0
      %728 = vmatprep.subr.bf16.mxu0 0
      %729 = vmatpush2.bf16.msra.mxu0 0
      %730 = vmatprep.subr.bf16.mxu0 0
      %731 = vmatpush2.bf16.msra.mxu0 0
      %732 = vmatprep.mubr.bf16.mxu0 0
      %733 = vmatmul.mubr.bf16.gmra.mxu0 %v458
      %v734 = vpop.f32.mrf.mxu0
      %v735 = vadd.f32 %v674, %v734
      %v736 = vpop.f32.mrf.mxu0
      %v737 = vpop.f32.mrf.mxu0
      %v738 = vadd.f32 %v674, %v737
      %v739 = vpop.f32.mrf.mxu0
      %740 = vmatprep.mubr.bf16.mxu0 0
      %741 = vmatmul.mubr.bf16.gmra.mxu0 %v461
      %v742 = vpop.f32.mrf.mxu0
      %v743 = vadd.f32 %v674, %v742
      %v744 = vpop.f32.mrf.mxu0
      %v745 = vpop.f32.mrf.mxu0
      %v746 = vadd.f32 %v674, %v745
      %v747 = vpop.f32.mrf.mxu0
      %748 = vmatprep.mubr.bf16.mxu0 0
      %749 = vmatmul.mubr.bf16.gmra.mxu0 %v464
      %v750 = vpop.f32.mrf.mxu0
      %v751 = vadd.f32 %v674, %v750
      %v752 = vpop.f32.mrf.mxu0
      %v753 = vpop.f32.mrf.mxu0
      %v754 = vadd.f32 %v674, %v753
      %v755 = vpop.f32.mrf.mxu0
      %756 = vmatprep.mubr.bf16.mxu0 0
      %757 = vmatmul.mubr.bf16.gmra.mxu0 %v467
      %v758 = vpop.f32.mrf.mxu0
      %v759 = vadd.f32 %v674, %v758
      %v760 = vpop.f32.mrf.mxu0
      %v761 = vpop.f32.mrf.mxu0
      %v762 = vadd.f32 %v674, %v761
      %v763 = vpop.f32.mrf.mxu0
      %764 = vmatprep.mubr.bf16.mxu0 0
      %765 = vmatmul.mubr.bf16.gmra.mxu0 %v470
      %v766 = vpop.f32.mrf.mxu0
      %v767 = vadd.f32 %v674, %v766
      %v768 = vpop.f32.mrf.mxu0
      %v769 = vpop.f32.mrf.mxu0
      %v770 = vadd.f32 %v674, %v769
      %v771 = vpop.f32.mrf.mxu0
      %772 = vmatprep.mubr.bf16.mxu0 0
      %773 = vmatmul.mubr.bf16.gmra.mxu0 %v473
      %v774 = vpop.f32.mrf.mxu0
      %v775 = vadd.f32 %v674, %v774
      %v776 = vpop.f32.mrf.mxu0
      %v777 = vpop.f32.mrf.mxu0
      %v778 = vadd.f32 %v674, %v777
      %v779 = vpop.f32.mrf.mxu0
      %780 = vmatprep.mubr.bf16.mxu0 0
      %781 = vmatmul.mubr.bf16.gmra.mxu0 %v476
      %v782 = vpop.f32.mrf.mxu0
      %v783 = vadd.f32 %v674, %v782
      %v784 = vpop.f32.mrf.mxu0
      %v785 = vpop.f32.mrf.mxu0
      %v786 = vadd.f32 %v674, %v785
      %v787 = vpop.f32.mrf.mxu0
      %788 = vmatprep.mubr.bf16.mxu0 0
      %789 = vmatmul.mubr.bf16.gmra.mxu0 %v479
      %v790 = vpop.f32.mrf.mxu0
      %v791 = vadd.f32 %v674, %v790
      %v792 = vpop.f32.mrf.mxu0
      %v793 = vpop.f32.mrf.mxu0
      %v794 = vadd.f32 %v674, %v793
      %v795 = vpop.f32.mrf.mxu0
      %796 = vdwg.mxu0
      %v797 = vpack.c.bf16 %v738, %v735
      %v798 = vpack.c.bf16 %v746, %v743
      %v799 = vpack.c.bf16 %v754, %v751
      %v800 = vpack.c.bf16 %v762, %v759
      %v801 = vpack.c.bf16 %v770, %v767
      %v802 = vpack.c.bf16 %v778, %v775
      %v803 = vpack.c.bf16 %v786, %v783
      %v804 = vpack.c.bf16 %v794, %v791
      %v813 = vunpack.c.l.b16 %v797
      %v814 = vunpack.c.h.b16 %v797
      %v815 = vunpack.c.l.b16 %v798
      %v816 = vunpack.c.h.b16 %v798
      %v817 = vunpack.c.l.b16 %v799
      %v818 = vunpack.c.h.b16 %v799
      %v819 = vunpack.c.l.b16 %v800
      %v820 = vunpack.c.h.b16 %v800
      %v821 = vunpack.c.l.b16 %v801
      %v822 = vunpack.c.h.b16 %v801
      %v823 = vunpack.c.l.b16 %v802
      %v824 = vunpack.c.h.b16 %v802
      %v825 = vunpack.c.l.b16 %v803
      %v826 = vunpack.c.h.b16 %v803
      %v827 = vunpack.c.l.b16 %v804
      %v828 = vunpack.c.h.b16 %v804
      %v829 = vpack.c.b16 %v813, %v813
      %v830 = vpack.c.b16 %v814, %v814
      %v831 = vpack.c.b16 %v815, %v815
      %v832 = vpack.c.b16 %v816, %v816
      %v833 = vpack.c.b16 %v817, %v817
      %v834 = vpack.c.b16 %v818, %v818
      %v835 = vpack.c.b16 %v819, %v819
      %v836 = vpack.c.b16 %v820, %v820
      %v837 = vpack.c.b16 %v821, %v821
      %v838 = vpack.c.b16 %v822, %v822
      %v839 = vpack.c.b16 %v823, %v823
      %v840 = vpack.c.b16 %v824, %v824
      %v841 = vpack.c.b16 %v825, %v825
      %v842 = vpack.c.b16 %v826, %v826
      %v843 = vpack.c.b16 %v827, %v827
      %v844 = vpack.c.b16 %v828, %v828
      %861 = vst.msk [vmem:[%s357] sm:$0xf] %vm642, %v829
      %862 = vst.msk [vmem:[%s357 + $0x4] sm:$0xf] %vm642, %v830
      %863 = vst.msk [vmem:[%s357 + $0x8] sm:$0xf] %vm642, %v831
      %864 = vst.msk [vmem:[%s357 + $0xc] sm:$0xf] %vm642, %v832
      %865 = vst.msk [vmem:[%s357 + $0x10] sm:$0xf] %vm642, %v833
      %866 = vst.msk [vmem:[%s357 + $0x14] sm:$0xf] %vm642, %v834
      %867 = vst.msk [vmem:[%s357 + $0x18] sm:$0xf] %vm642, %v835
      %868 = vst.msk [vmem:[%s357 + $0x1c] sm:$0xf] %vm642, %v836
      %869 = vst.msk [vmem:[%s357 + $0x20] sm:$0xf] %vm642, %v837
      %870 = vst.msk [vmem:[%s357 + $0x24] sm:$0xf] %vm642, %v838
      %871 = vst.msk [vmem:[%s357 + $0x28] sm:$0xf] %vm642, %v839
      %872 = vst.msk [vmem:[%s357 + $0x2c] sm:$0xf] %vm642, %v840
      %873 = vst.msk [vmem:[%s357 + $0x30] sm:$0xf] %vm642, %v841
      %874 = vst.msk [vmem:[%s357 + $0x34] sm:$0xf] %vm642, %v842
      %875 = vst.msk [vmem:[%s357 + $0x38] sm:$0xf] %vm642, %v843
      %876 = vst.msk [vmem:[%s357 + $0x3c] sm:$0xf] %vm642, %v844
      %s877 = scalar_lea.vmem %s3, 64
      %v878 = vld [vmem:[%s877] sm:$0xf]
      %v879 = vld [vmem:[%s877 + $0x4] sm:$0xf]
      %v880 = vld [vmem:[%s877 + $0x8] sm:$0xf]
      %v881 = vld [vmem:[%s877 + $0xc] sm:$0xf]
      %v882 = vld [vmem:[%s877 + $0x10] sm:$0xf]
      %v883 = vld [vmem:[%s877 + $0x14] sm:$0xf]
      %v884 = vld [vmem:[%s877 + $0x18] sm:$0xf]
      %v885 = vld [vmem:[%s877 + $0x1c] sm:$0xf]
      %s886 = scalar_lea.vmem %s338, 2
      %v887 = vld [vmem:[%s886] sm:$0x1]
      %v889 = vlaneseq
      %v890 = vshrl.u32 %v889, 7
      %v891 = vsub.s32 0, %v890
      %v892 = vrot.slane %v887, %v891
      %v902 = vunpack.c.l.b16 %v878
      %v903 = vunpack.c.l.b16 %v879
      %v904 = vunpack.c.l.b16 %v880
      %v905 = vunpack.c.l.b16 %v881
      %v906 = vunpack.c.l.b16 %v882
      %v907 = vunpack.c.l.b16 %v883
      %v908 = vunpack.c.l.b16 %v884
      %v909 = vunpack.c.l.b16 %v885
      %v910 = vpack.c.b16 %v903, %v902
      %v911 = vpack.c.b16 %v905, %v904
      %v912 = vpack.c.b16 %v907, %v906
      %v913 = vpack.c.b16 %v909, %v908
      %918 = vmatprep.subr.bf16.mxu0 0
      %919 = vmatpush1.bf16.msra.mxu0 0
      %920 = vmatprep.subr.bf16.mxu0 0
      %921 = vmatpush1.bf16.msra.mxu0 0
      %922 = vmatprep.subr.bf16.mxu0 0
      %923 = vmatpush1.bf16.msra.mxu0 0
      %924 = vmatprep.subr.bf16.mxu0 0
      %925 = vmatpush1.bf16.msra.mxu0 0
      %926 = vmatprep.subr.bf16.mxu0 0
      %927 = vmatpush1.bf16.msra.mxu0 %v913
      %928 = vmatprep.subr.bf16.mxu0 0
      %929 = vmatpush1.bf16.msra.mxu0 %v912
      %930 = vmatprep.subr.bf16.mxu0 0
      %931 = vmatpush1.bf16.msra.mxu0 %v911
      %932 = vmatprep.subr.bf16.mxu0 0
      %933 = vmatpush1.bf16.msra.mxu0 %v910
      %934 = vmatprep.subr.bf16.mxu0 0
      %935 = vmatpush2.bf16.msra.mxu0 0
      %936 = vmatprep.subr.bf16.mxu0 0
      %937 = vmatpush2.bf16.msra.mxu0 0
      %938 = vmatprep.subr.bf16.mxu0 0
      %939 = vmatpush2.bf16.msra.mxu0 0
      %940 = vmatprep.subr.bf16.mxu0 0
      %941 = vmatpush2.bf16.msra.mxu0 0
      %942 = vmatprep.subr.bf16.mxu0 0
      %943 = vmatpush2.bf16.msra.mxu0 0
      %944 = vmatprep.subr.bf16.mxu0 0
      %945 = vmatpush2.bf16.msra.mxu0 0
      %946 = vmatprep.subr.bf16.mxu0 0
      %947 = vmatpush2.bf16.msra.mxu0 0
      %948 = vmatprep.subr.bf16.mxu0 0
      %949 = vmatpush2.bf16.msra.mxu0 0
      %950 = vmatprep.mubr.bf16.mxu0 0
      %951 = vmatmul.mubr.bf16.gmra.mxu0 %v458
      %v952 = vpop.f32.mrf.mxu0
      %v953 = vadd.f32 %v892, %v952
      %v954 = vpop.f32.mrf.mxu0
      %v955 = vpop.f32.mrf.mxu0
      %v956 = vadd.f32 %v892, %v955
      %v957 = vpop.f32.mrf.mxu0
      %958 = vmatprep.mubr.bf16.mxu0 0
      %959 = vmatmul.mubr.bf16.gmra.mxu0 %v461
      %v960 = vpop.f32.mrf.mxu0
      %v961 = vadd.f32 %v892, %v960
      %v962 = vpop.f32.mrf.mxu0
      %v963 = vpop.f32.mrf.mxu0
      %v964 = vadd.f32 %v892, %v963
      %v965 = vpop.f32.mrf.mxu0
      %966 = vmatprep.mubr.bf16.mxu0 0
      %967 = vmatmul.mubr.bf16.gmra.mxu0 %v464
      %v968 = vpop.f32.mrf.mxu0
      %v969 = vadd.f32 %v892, %v968
      %v970 = vpop.f32.mrf.mxu0
      %v971 = vpop.f32.mrf.mxu0
      %v972 = vadd.f32 %v892, %v971
      %v973 = vpop.f32.mrf.mxu0
      %974 = vmatprep.mubr.bf16.mxu0 0
      %975 = vmatmul.mubr.bf16.gmra.mxu0 %v467
      %v976 = vpop.f32.mrf.mxu0
      %v977 = vadd.f32 %v892, %v976
      %v978 = vpop.f32.mrf.mxu0
      %v979 = vpop.f32.mrf.mxu0
      %v980 = vadd.f32 %v892, %v979
      %v981 = vpop.f32.mrf.mxu0
      %982 = vmatprep.mubr.bf16.mxu0 0
      %983 = vmatmul.mubr.bf16.gmra.mxu0 %v470
      %v984 = vpop.f32.mrf.mxu0
      %v985 = vadd.f32 %v892, %v984
      %v986 = vpop.f32.mrf.mxu0
      %v987 = vpop.f32.mrf.mxu0
      %v988 = vadd.f32 %v892, %v987
      %v989 = vpop.f32.mrf.mxu0
      %990 = vmatprep.mubr.bf16.mxu0 0
      %991 = vmatmul.mubr.bf16.gmra.mxu0 %v473
      %v992 = vpop.f32.mrf.mxu0
      %v993 = vadd.f32 %v892, %v992
      %v994 = vpop.f32.mrf.mxu0
      %v995 = vpop.f32.mrf.mxu0
      %v996 = vadd.f32 %v892, %v995
      %v997 = vpop.f32.mrf.mxu0
      %998 = vmatprep.mubr.bf16.mxu0 0
      %999 = vmatmul.mubr.bf16.gmra.mxu0 %v476
      %v1000 = vpop.f32.mrf.mxu0
      %v1001 = vadd.f32 %v892, %v1000
      %v1002 = vpop.f32.mrf.mxu0
      %v1003 = vpop.f32.mrf.mxu0
      %v1004 = vadd.f32 %v892, %v1003
      %v1005 = vpop.f32.mrf.mxu0
      %1006 = vmatprep.mubr.bf16.mxu0 0
      %1007 = vmatmul.mubr.bf16.gmra.mxu0 %v479
      %v1008 = vpop.f32.mrf.mxu0
      %v1009 = vadd.f32 %v892, %v1008
      %v1010 = vpop.f32.mrf.mxu0
      %v1011 = vpop.f32.mrf.mxu0
      %v1012 = vadd.f32 %v892, %v1011
      %v1013 = vpop.f32.mrf.mxu0
      %1014 = vdwg.mxu0
      %v1015 = vpack.c.bf16 %v956, %v953
      %v1016 = vpack.c.bf16 %v964, %v961
      %v1017 = vpack.c.bf16 %v972, %v969
      %v1018 = vpack.c.bf16 %v980, %v977
      %v1019 = vpack.c.bf16 %v988, %v985
      %v1020 = vpack.c.bf16 %v996, %v993
      %v1021 = vpack.c.bf16 %v1004, %v1001
      %v1022 = vpack.c.bf16 %v1012, %v1009
      %v1031 = vunpack.c.l.b16 %v1015
      %v1032 = vunpack.c.h.b16 %v1015
      %v1033 = vunpack.c.l.b16 %v1016
      %v1034 = vunpack.c.h.b16 %v1016
      %v1035 = vunpack.c.l.b16 %v1017
      %v1036 = vunpack.c.h.b16 %v1017
      %v1037 = vunpack.c.l.b16 %v1018
      %v1038 = vunpack.c.h.b16 %v1018
      %v1039 = vunpack.c.l.b16 %v1019
      %v1040 = vunpack.c.h.b16 %v1019
      %v1041 = vunpack.c.l.b16 %v1020
      %v1042 = vunpack.c.h.b16 %v1020
      %v1043 = vunpack.c.l.b16 %v1021
      %v1044 = vunpack.c.h.b16 %v1021
      %v1045 = vunpack.c.l.b16 %v1022
      %v1046 = vunpack.c.h.b16 %v1022
      %v1047 = vpack.c.b16 %v1031, %v1031
      %v1048 = vpack.c.b16 %v1032, %v1032
      %v1049 = vpack.c.b16 %v1033, %v1033
      %v1050 = vpack.c.b16 %v1034, %v1034
      %v1051 = vpack.c.b16 %v1035, %v1035
      %v1052 = vpack.c.b16 %v1036, %v1036
      %v1053 = vpack.c.b16 %v1037, %v1037
      %v1054 = vpack.c.b16 %v1038, %v1038
      %v1055 = vpack.c.b16 %v1039, %v1039
      %v1056 = vpack.c.b16 %v1040, %v1040
      %v1057 = vpack.c.b16 %v1041, %v1041
      %v1058 = vpack.c.b16 %v1042, %v1042
      %v1059 = vpack.c.b16 %v1043, %v1043
      %v1060 = vpack.c.b16 %v1044, %v1044
      %v1061 = vpack.c.b16 %v1045, %v1045
      %v1062 = vpack.c.b16 %v1046, %v1046
      %1079 = vst.msk [vmem:[%s367] sm:$0xf] %vm642, %v1047
      %1080 = vst.msk [vmem:[%s367 + $0x4] sm:$0xf] %vm642, %v1048
      %1081 = vst.msk [vmem:[%s367 + $0x8] sm:$0xf] %vm642, %v1049
      %1082 = vst.msk [vmem:[%s367 + $0xc] sm:$0xf] %vm642, %v1050
      %1083 = vst.msk [vmem:[%s367 + $0x10] sm:$0xf] %vm642, %v1051
      %1084 = vst.msk [vmem:[%s367 + $0x14] sm:$0xf] %vm642, %v1052
      %1085 = vst.msk [vmem:[%s367 + $0x18] sm:$0xf] %vm642, %v1053
      %1086 = vst.msk [vmem:[%s367 + $0x1c] sm:$0xf] %vm642, %v1054
      %1087 = vst.msk [vmem:[%s367 + $0x20] sm:$0xf] %vm642, %v1055
      %1088 = vst.msk [vmem:[%s367 + $0x24] sm:$0xf] %vm642, %v1056
      %1089 = vst.msk [vmem:[%s367 + $0x28] sm:$0xf] %vm642, %v1057
      %1090 = vst.msk [vmem:[%s367 + $0x2c] sm:$0xf] %vm642, %v1058
      %1091 = vst.msk [vmem:[%s367 + $0x30] sm:$0xf] %vm642, %v1059
      %1092 = vst.msk [vmem:[%s367 + $0x34] sm:$0xf] %vm642, %v1060
      %1093 = vst.msk [vmem:[%s367 + $0x38] sm:$0xf] %vm642, %v1061
      %1094 = vst.msk [vmem:[%s367 + $0x3c] sm:$0xf] %vm642, %v1062
      %s1095 = smul.u32 16, %s23
      %p1096 = scmp.lt.s32.totalorder %s22, 1
      %s1097 = scalar_select %p1096, %s22, 1
      %p1098 = scmp.lt.s32.totalorder %s1095, 31
      %s1099 = scalar_select %p1098, %s1095, 31
      %s1100 = smul.addr %s1097, 32
      %s1101 = sadd.s32 %s1099, %s1100
      %s1102 = smul.addr %s1101, 4
      %s1103 = scalar_lea.vmem %s4, %s1102
      %s1104 = smul.u32 16, %s23
      %p1105 = scmp.lt.s32.totalorder %s22, 1
      %s1106 = scalar_select %p1105, %s22, 1
      %p1107 = scmp.lt.s32.totalorder %s1104, 31
      %s1108 = scalar_select %p1107, %s1104, 31
      %s1109 = smul.addr %s1106, 32
      %s1110 = sadd.s32 %s1108, %s1109
      %s1111 = smul.addr %s1110, 4
      %s1112 = scalar_lea.vmem %s5, %s1111
      %s1113 = smul.u32 16, %s23
      %p1114 = scmp.lt.s32.totalorder %s22, 1
      %s1115 = scalar_select %p1114, %s22, 1
      %p1116 = scmp.lt.s32.totalorder %s1113, 31
      %s1117 = scalar_select %p1116, %s1113, 31
      %s1118 = smul.addr %s1115, 32
      %s1119 = sadd.s32 %s1117, %s1118
      %s1120 = smul.addr %s1119, 4
      %s1121 = scalar_lea.vmem %s6, %s1120
      // Predicated region
      $region37: #{tpu_custom_call.1} parent=35 // pred_check
        %p1122 = pneg %p151
      $region38: #{tpu_custom_call.1} parent=35 // pred_check_branch
        %1124 = sbr.rel (%p1122) target = $region40
      $region39: #{tpu_custom_call.1} parent=35 // pred_region
        %s1125 = smul.u32 16, %s23
      $region40: #{tpu_custom_call.1} parent=35 // pred_fallthru
        _
      // Predicated region
      $region41: #{tpu_custom_call.1} parent=35 // pred_check
        %p1126 = pneg %p179
      $region42: #{tpu_custom_call.1} parent=35 // pred_check_branch
        %1128 = sbr.rel (%p1126) target = $region44
      $region43: #{tpu_custom_call.1} parent=35 // pred_region
        %s1129 = smul.u32 16, %s23
      $region44: #{tpu_custom_call.1} parent=35 // pred_fallthru
        _
      // Predicated region
      $region45: #{tpu_custom_call.1} parent=35 // pred_check
        %p1130 = pneg %p207
      $region46: #{tpu_custom_call.1} parent=35 // pred_check_branch
        %1132 = sbr.rel (%p1130) target = $region48
      $region47: #{tpu_custom_call.1} parent=35 // pred_region
        %s1133 = smul.u32 16, %s23
      $region48: #{tpu_custom_call.1} parent=35 // pred_fallthru
        _
    $region36: #{tpu_custom_call.1} parent=5 // pred_fallthru
      _
    %p1134 = scmp.le.s32.totalorder 2, %s13
    // Predicated region
    $region49: #{tpu_custom_call.1} parent=5 // pred_check
      %p1135 = pneg %p1134
    $region50: #{tpu_custom_call.1} parent=5 // pred_check_branch
      %1137 = sbr.rel (%p1135) target = $region52
    $region51: #{tpu_custom_call.1} parent=5 // pred_region
      %s1138 = ssub.s32 %s13, 2
      // Predicated region
      $region53: #{tpu_custom_call.1} parent=51 // pred_check
        %p1139 = pneg %p157
      $region54: #{tpu_custom_call.1} parent=51 // pred_check_branch
        %1141 = sbr.rel (%p1139) target = $region56
      $region55: #{tpu_custom_call.1} parent=51 // pred_region
        %s1142 = smul.u32 16, %s25
        %p1143 = scmp.lt.s32.totalorder %s24, 1
        %s1144 = scalar_select %p1143, %s24, 1
        %p1145 = scmp.lt.s32.totalorder %s1142, 31
        %s1146 = scalar_select %p1145, %s1142, 31
        %s1147 = smul.addr %s1144, 32
        %s1148 = sadd.s32 %s1146, %s1147
        %s1149 = smul.addr %s1148, 4
        %s1150 = scalar_lea.vmem %s4, %s1149
      $region56: #{tpu_custom_call.1} parent=51 // pred_fallthru
        _
      // Predicated region
      $region57: #{tpu_custom_call.1} parent=51 // pred_check
        %p1151 = pneg %p185
      $region58: #{tpu_custom_call.1} parent=51 // pred_check_branch
        %1153 = sbr.rel (%p1151) target = $region60
      $region59: #{tpu_custom_call.1} parent=51 // pred_region
        %s1154 = smul.u32 16, %s25
        %p1155 = scmp.lt.s32.totalorder %s24, 1
        %s1156 = scalar_select %p1155, %s24, 1
        %p1157 = scmp.lt.s32.totalorder %s1154, 31
        %s1158 = scalar_select %p1157, %s1154, 31
        %s1159 = smul.addr %s1156, 32
        %s1160 = sadd.s32 %s1158, %s1159
        %s1161 = smul.addr %s1160, 4
        %s1162 = scalar_lea.vmem %s5, %s1161
      $region60: #{tpu_custom_call.1} parent=51 // pred_fallthru
        _
      // Predicated region
      $region61: #{tpu_custom_call.1} parent=51 // pred_check
        %p1163 = pneg %p213
      $region62: #{tpu_custom_call.1} parent=51 // pred_check_branch
        %1165 = sbr.rel (%p1163) target = $region64
      $region63: #{tpu_custom_call.1} parent=51 // pred_region
        %s1166 = smul.u32 16, %s25
        %p1167 = scmp.lt.s32.totalorder %s24, 1
        %s1168 = scalar_select %p1167, %s24, 1
        %p1169 = scmp.lt.s32.totalorder %s1166, 31
        %s1170 = scalar_select %p1169, %s1166, 31
        %s1171 = smul.addr %s1168, 32
        %s1172 = sadd.s32 %s1170, %s1171
        %s1173 = smul.addr %s1172, 4
        %s1174 = scalar_lea.vmem %s6, %s1173
      $region64: #{tpu_custom_call.1} parent=51 // pred_fallthru
        _
    $region52: #{tpu_custom_call.1} parent=5 // pred_fallthru
      _
  $region6: #{tpu_custom_call.1} parent=0 // loop_footer
    %s17 = sadd.s32 1, %s13
  $region7: #{tpu_custom_call.1} parent=0 // loop_footer_branch
    %12 = sbr.rel target = $region3
  $region8: #{tpu_custom_call.1} parent=0 // loop_exit
    _

</llo_original>
